<compile_context>
chip_gen: v5e
topology: v5e:2x2
jax: 0.10.0
libtpu: 0.0.40
codegen_flags: <defaults>
</compile_context>

<pallas_src>
import jax
import jax.numpy as jnp
from jax.experimental import pallas as pl
from jax.experimental.pallas import tpu as pltpu

_ROWS = 8                       # sublane rows per image tile
_LANES_MIN = 128                # lane quantum
_BLOCK_BUDGET = 2 << 20         # ~2 MiB per image block (safe incl. v7x)
_VMEM_LIMIT = 32 * 1024 * 1024  # explicit scoped-VMEM limit for all calls


def _round_up(x, m):
    return ((x + m - 1) // m) * m


# ---------------------------------------------------------------------------
# Kernels
# ---------------------------------------------------------------------------

def _add_noise_kernel(coef_ref, x0_ref, noise_ref, noisy_ref):
    """noisy = sqrt(alpha_bar[t]) * x0 + sqrt(1 - alpha_bar[t]) * noise."""
    sab = coef_ref[:, 0:1]
    s1m = coef_ref[:, 1:2]
    x0 = x0_ref[...].astype(jnp.float32)
    z = noise_ref[...].astype(jnp.float32)
    noisy_ref[...] = (sab * x0 + s1m * z).astype(noisy_ref.dtype)


def _sample_step_kernel(coef_ref, xt_ref, eps_ref, z_ref, out_ref):
    """One reverse-diffusion step with pre-fused coefficients:
         mean = sqrt(1/alpha[t]) * xt
                - (sqrt(1/alpha[t]) * beta[t] / sqrt(1 - alpha_bar[t])) * eps
         xt'  = mean + sigma_or_zero[t] * z
    """
    sia = coef_ref[:, 0:1]
    c2 = coef_ref[:, 1:2]
    sig = coef_ref[:, 2:3]
    xt = xt_ref[...].astype(jnp.float32)
    eps = eps_ref[...].astype(jnp.float32)
    z = z_ref[...].astype(jnp.float32)
    out_ref[...] = (sia * xt - c2 * eps + sig * z).astype(out_ref.dtype)


def _loss_kernel(noise_ref, pred_ref, out_ref, acc_ref):
    """Per-parallel-slice partial sum of (noise - pred)^2.  Vector partials
    accumulate in VMEM scratch along the trailing (arbitrary) grid axis; the
    cross-lane reduce happens once per slice on the last step."""
    j = pl.program_id(1)

    @pl.when(j == 0)
    def _():
        acc_ref[...] = jnp.zeros_like(acc_ref)
        out_ref[...] = jnp.zeros_like(out_ref)

    d = noise_ref[...].astype(jnp.float32) - pred_ref[...].astype(jnp.float32)
    acc_ref[...] += d * d

    @pl.when(j == pl.num_programs(1) - 1)
    def _():
        out_ref[...] = jnp.broadcast_to(jnp.sum(acc_ref[...]), out_ref.shape)


# ---------------------------------------------------------------------------
# Packing / tiling helpers
# ---------------------------------------------------------------------------

def _chw(shape):
    n = 1
    for d in shape[1:]:
        n *= d
    return n


def _lanes_for(shape):
    return _round_up(_chw(shape), _ROWS * _LANES_MIN) // _ROWS


def _pack_images(x, b_pad):
    """(B, C, H, W) -> (b_pad * 8, lanes) vreg-dense packing, zero-padded."""
    B = x.shape[0]
    chw = _chw(x.shape)
    chw_pad = _round_up(chw, _ROWS * _LANES_MIN)
    lanes = chw_pad // _ROWS
    xf = x.reshape(B, chw)
    if chw_pad != chw or b_pad != B:
        xf = jnp.pad(xf, ((0, b_pad - B), (0, chw_pad - chw)))
    return xf.reshape(b_pad * _ROWS, lanes)


def _unpack_images(y, shape):
    B = shape[0]
    chw = _chw(shape)
    chw_pad = _round_up(chw, _ROWS * _LANES_MIN)
    return y.reshape(-1, chw_pad)[:B, :chw].reshape(shape)


def _coef_columns(per_batch_vals, b_pad):
    """Stack per-batch scalar coefficient vectors into one (b_pad*8, k) array
    (row-broadcast inside the kernel; a single small pipeline stream)."""
    cols = []
    for v in per_batch_vals:
        v = jnp.pad(v.astype(jnp.float32), (0, b_pad - v.shape[0]))
        cols.append(jnp.repeat(v, _ROWS))
    return jnp.stack(cols, axis=-1)


def _choose_bb(batch, lanes, itemsize=4):
    """Batch elements per grid step: as big as the ~2 MiB block budget allows,
    but always leaving >= 2 grid steps so v7x megacore shards the work."""
    per_image = _ROWS * lanes * itemsize
    bb = max(1, min(batch, _BLOCK_BUDGET // max(per_image, 1)))
    if batch >= 2:
        bb = min(bb, -(-batch // 2))
    return bb


def _img_spec_1d(block_rows, lanes):
    return pl.BlockSpec((block_rows, lanes), lambda i: (i, 0))


def _coef_spec_1d(block_rows, k):
    return pl.BlockSpec((block_rows, k), lambda i: (i, 0))


# ---------------------------------------------------------------------------
# DDPM module (JAX/Pallas port of the schedule math)
# ---------------------------------------------------------------------------

class DDPM:
    def __init__(self, in_c, timestep):
        beta_min, beta_max = 1e-4, 0.02
        self.in_c = in_c
        self.timestep = timestep
        self.beta = jnp.linspace(beta_min, beta_max, timestep, dtype=jnp.float32)
        self.alpha = 1.0 - self.beta
        self.sqrt_inverse_alpha = jnp.sqrt(1.0 / self.alpha)
        self.alpha_bar = jnp.cumprod(self.alpha)
        self.alpha_bar_pre = jnp.pad(self.alpha_bar[:-1], (1, 0),
                                     constant_values=1.0)
        self.sqrt_alpha_bar = jnp.sqrt(self.alpha_bar)
        self.sqrt_one_minus_alpha_bar = jnp.sqrt(1.0 - self.alpha_bar)
        self.sigma = jnp.sqrt(self.beta * (1.0 - self.alpha_bar_pre)
                              / (1.0 - self.alpha_bar))
        # Fused reverse-step coefficient: sqrt(1/alpha) * beta / sqrt(1 - ab).
        self.eps_coef = (self.sqrt_inverse_alpha * self.beta
                         / self.sqrt_one_minus_alpha_bar)

    # -- forward -------------------------------------------------------------
    def forward(self, x, t):
        # TODO(synk): Unet source was not provided; DDPM.forward just calls
        # self.denoise_model(x, t) and cannot be reproduced faithfully.
        raise NotImplementedError("denoise_model (Unet) source not provided")

    # -- q(x_t | x_0) ----------------------------------------------------------
    def add_noise(self, x0, t, key):
        B = x0.shape[0]
        lanes = _lanes_for(x0.shape)
        bb = _choose_bb(B, lanes)
        b_pad = _round_up(B, bb)
        grid = (b_pad // bb,)

        noise = jax.random.normal(key, x0.shape, x0.dtype)
        x0_r = _pack_images(x0, b_pad)
        nz_r = _pack_images(noise, b_pad)
        coef = _coef_columns(
            [jnp.take(self.sqrt_alpha_bar, t),
             jnp.take(self.sqrt_one_minus_alpha_bar, t)], b_pad)

        noisy_r = pl.pallas_call(
            _add_noise_kernel,
            out_shape=jax.ShapeDtypeStruct((b_pad * _ROWS, lanes), x0.dtype),
            grid=grid,
            in_specs=[
                _coef_spec_1d(bb * _ROWS, 2),        # [sqrt_ab, sqrt_1m_ab]
                _img_spec_1d(bb * _ROWS, lanes),     # x0
                _img_spec_1d(bb * _ROWS, lanes),     # noise
            ],
            out_specs=_img_spec_1d(bb * _ROWS, lanes),
            compiler_params=pltpu.CompilerParams(
                dimension_semantics=("parallel",),
                vmem_limit_bytes=_VMEM_LIMIT),
        )(coef, x0_r, nz_r)
        return noise, _unpack_images(noisy_r, x0.shape)

    # -- one reverse step of sample() ------------------------------------------
    def sample_step(self, xt, eps, t, key):
        B = xt.shape[0]
        lanes = _lanes_for(xt.shape)
        bb = _choose_bb(B, lanes)
        b_pad = _round_up(B, bb)
        grid = (b_pad // bb,)

        z = jax.random.normal(key, xt.shape, xt.dtype)
        xt_r = _pack_images(xt, b_pad)
        eps_r = _pack_images(eps, b_pad)
        z_r = _pack_images(z, b_pad)
        sig_t = jnp.where(t > 0, jnp.take(self.sigma, t), 0.0)
        coef = _coef_columns(
            [jnp.take(self.sqrt_inverse_alpha, t),
             jnp.take(self.eps_coef, t),
             sig_t], b_pad)

        out_r = pl.pallas_call(
            _sample_step_kernel,
            out_shape=jax.ShapeDtypeStruct((b_pad * _ROWS, lanes), xt.dtype),
            grid=grid,
            in_specs=[
                _coef_spec_1d(bb * _ROWS, 3),        # [sia, fused eps coef, sigma]
                _img_spec_1d(bb * _ROWS, lanes),     # xt
                _img_spec_1d(bb * _ROWS, lanes),     # eps (predicted noise)
                _img_spec_1d(bb * _ROWS, lanes),     # z
            ],
            out_specs=_img_spec_1d(bb * _ROWS, lanes),
            compiler_params=pltpu.CompilerParams(
                dimension_semantics=("parallel",),
                vmem_limit_bytes=_VMEM_LIMIT),
        )(coef, xt_r, eps_r, z_r)
        return _unpack_images(out_r, xt.shape), z

    # -- loss ------------------------------------------------------------------
    def loss(self, noise, predict):
        B = predict.shape[0]
        lanes = _lanes_for(predict.shape)
        bb = _choose_bb(B, lanes)
        b_pad = _round_up(B, bb)
        n_blocks = b_pad // bb
        npar = 2 if n_blocks % 2 == 0 else 1   # split across both v7x TCs
        nsteps = n_blocks // npar

        n_r = _pack_images(noise, b_pad)
        p_r = _pack_images(predict, b_pad)

        img_spec = pl.BlockSpec((bb * _ROWS, lanes),
                                lambda i, j, ns=nsteps: (i * ns + j, 0))
        out = pl.pallas_call(
            _loss_kernel,
            out_shape=jax.ShapeDtypeStruct((npar * _ROWS, _LANES_MIN),
                                           jnp.float32),
            grid=(npar, nsteps),
            in_specs=[img_spec, img_spec],
            out_specs=pl.BlockSpec((_ROWS, _LANES_MIN), lambda i, j: (i, 0)),
            scratch_shapes=[pltpu.VMEM((bb * _ROWS, lanes), jnp.float32)],
            compiler_params=pltpu.CompilerParams(
                dimension_semantics=("parallel", "arbitrary"),
                vmem_limit_bytes=_VMEM_LIMIT),
        )(n_r, p_r)
        partials = out[0::_ROWS, 0]            # one scalar per parallel slice
        # l2loss = C*H*W * mse(noise, pred) = sum((noise - pred)^2) / B
        return jnp.sum(partials) / B


# ---------------------------------------------------------------------------
# Main: build small inputs, run kernels, check against pure-JAX references
# ---------------------------------------------------------------------------

if __name__ == "__main__":
    B, C, H, W = 2, 4, 16, 16
    T = 100

    ddpm = DDPM(in_c=C, timestep=T)

    key = jax.random.PRNGKey(0)
    k_x0, k_t, k_eps, k_noise, k_z = jax.random.split(key, 5)
    x0 = jax.random.normal(k_x0, (B, C, H, W), jnp.float32)
    t = jax.random.randint(k_t, (B,), 0, T, jnp.int32)

    def _ext(a, tt):
        return jnp.take(a, tt)[:, None, None, None]

    # --- q(x_t | x_0) ---------------------------------------------------------
    noise, noisy = ddpm.add_noise(x0, t, key=k_noise)
    noisy = jax.block_until_ready(noisy)
    noisy_ref = (_ext(ddpm.sqrt_alpha_bar, t) * x0
                 + _ext(ddpm.sqrt_one_minus_alpha_bar, t) * noise)
    assert jnp.allclose(noisy, noisy_ref, rtol=1e-4, atol=1e-5)

    # --- one reverse-diffusion step (eps stands in for the missing Unet) -----
    eps = jax.random.normal(k_eps, (B, C, H, W), jnp.float32)
    t_step = jnp.array([T - 1, 0], dtype=jnp.int32)   # exercise both branches
    xt_next, z_used = ddpm.sample_step(noisy, eps, t_step, key=k_z)
    xt_next = jax.block_until_ready(xt_next)
    mean_ref = _ext(ddpm.sqrt_inverse_alpha, t_step) * (
        noisy - _ext(ddpm.beta, t_step)
        / _ext(ddpm.sqrt_one_minus_alpha_bar, t_step) * eps)
    sig_ref = jnp.where(t_step > 0, jnp.take(ddpm.sigma, t_step),
                        0.0)[:, None, None, None]
    xt_next_ref = mean_ref + sig_ref * z_used
    assert jnp.allclose(xt_next, xt_next_ref, rtol=1e-4, atol=1e-5)

    # --- scaled-MSE loss ------------------------------------------------------
    l2 = jax.block_until_ready(ddpm.loss(noise, eps))
    l2_ref = C * H * W * jnp.mean((noise - eps) ** 2)
    assert jnp.allclose(l2, l2_ref, rtol=1e-4, atol=1e-4)

    # --- odd / unaligned shapes exercise the wrapper-side padding path -------
    B2, C2, H2, W2 = 3, 3, 10, 10
    x0b = jax.random.normal(jax.random.PRNGKey(3), (B2, C2, H2, W2), jnp.float32)
    tb = jnp.array([5, 50, 99], jnp.int32)
    nb, nob = ddpm.add_noise(x0b, tb, key=jax.random.PRNGKey(4))
    nob = jax.block_until_ready(nob)
    nob_ref = (_ext(ddpm.sqrt_alpha_bar, tb) * x0b
               + _ext(ddpm.sqrt_one_minus_alpha_bar, tb) * nb)
    assert jnp.allclose(nob, nob_ref, rtol=1e-4, atol=1e-5)
    epsb = jax.random.normal(jax.random.PRNGKey(5), (B2, C2, H2, W2), jnp.float32)
    l2b = jax.block_until_ready(ddpm.loss(nb, epsb))
    l2b_ref = C2 * H2 * W2 * jnp.mean((nb - epsb) ** 2)
    assert jnp.allclose(l2b, l2b_ref, rtol=1e-4, atol=1e-4)

    print("KERNEL_OK")
</pallas_src>

<mosaic_0001>
module attributes {stable_mosaic.version = 11 : i64} {
  func.func @_add_noise_kernel(%arg0: i32, %arg1: memref<8x2xf32, #tpu.memory_space<vmem>>, %arg2: memref<8x128xf32, #tpu.memory_space<vmem>>, %arg3: memref<8x128xf32, #tpu.memory_space<vmem>>, %arg4: memref<8x128xf32, #tpu.memory_space<vmem>>) attributes {dimension_semantics = [#tpu.dimension_semantics<parallel>], iteration_bounds = array<i64: 2>, scalar_prefetch = 0 : i64, scratch_operands = 0 : i64, tpu.core_type = #tpu.core_type<tc>, window_params = [{transform_indices = @transform_0, window_bounds = array<i64: 8, 2>}, {transform_indices = @transform_1, window_bounds = array<i64: 8, 128>}, {transform_indices = @transform_2, window_bounds = array<i64: 8, 128>}, {transform_indices = @transform_3, window_bounds = array<i64: 8, 128>}]} {
    %c0 = arith.constant 0 : index
    %c0_0 = arith.constant 0 : index
    %0 = vector.load %arg1[%c0, %c0_0] : memref<8x2xf32, #tpu.memory_space<vmem>>, vector<8x1xf32>
    %c0_1 = arith.constant 0 : index
    %c1 = arith.constant 1 : index
    %1 = vector.load %arg1[%c0_1, %c1] : memref<8x2xf32, #tpu.memory_space<vmem>>, vector<8x1xf32>
    %c0_2 = arith.constant 0 : index
    %c0_3 = arith.constant 0 : index
    %2 = vector.load %arg2[%c0_2, %c0_3] : memref<8x128xf32, #tpu.memory_space<vmem>>, vector<8x128xf32>
    %c0_4 = arith.constant 0 : index
    %c0_5 = arith.constant 0 : index
    %3 = vector.load %arg3[%c0_4, %c0_5] : memref<8x128xf32, #tpu.memory_space<vmem>>, vector<8x128xf32>
    %4 = vector.broadcast %0 : vector<8x1xf32> to vector<8x128xf32>
    %5 = arith.mulf %4, %2 : vector<8x128xf32>
    %6 = vector.broadcast %1 : vector<8x1xf32> to vector<8x128xf32>
    %7 = arith.mulf %6, %3 : vector<8x128xf32>
    %8 = arith.addf %5, %7 : vector<8x128xf32>
    %c0_6 = arith.constant 0 : index
    %c0_7 = arith.constant 0 : index
    %9 = vector.load %arg4[%c0_6, %c0_7] : memref<8x128xf32, #tpu.memory_space<vmem>>, vector<8x128xf32>
    tpu.vector_store %arg4[%c0_6, %c0_7], %8 {strides = array<i32>} : memref<8x128xf32, #tpu.memory_space<vmem>>, vector<8x128xf32>,
    return
  }
  func.func @transform_0(%arg0: i32) -> (i32, i32) {
    %c0_i32 = arith.constant 0 : i32
    %c0_i32_0 = arith.constant 0 : i32
    return %arg0, %c0_i32 : i32, i32
  }
  func.func @transform_1(%arg0: i32) -> (i32, i32) {
    %c0_i32 = arith.constant 0 : i32
    %c0_i32_0 = arith.constant 0 : i32
    return %arg0, %c0_i32 : i32, i32
  }
  func.func @transform_2(%arg0: i32) -> (i32, i32) {
    %c0_i32 = arith.constant 0 : i32
    %c0_i32_0 = arith.constant 0 : i32
    return %arg0, %c0_i32 : i32, i32
  }
  func.func @transform_3(%arg0: i32) -> (i32, i32) {
    %c0_i32 = arith.constant 0 : i32
    %c0_i32_0 = arith.constant 0 : i32
    return %arg0, %c0_i32 : i32, i32
  }
}

</mosaic_0001>

<llo_original>
// kernel: tpu_custom_call.1
$region0: #{tpu_custom_call.1}
  #allocation0 [shape = 'u32[]', space=smem, size = 0x4, offset = 0x4, fixed_abs, tag = 'smem constant byte address 0x4 - core index']
  #allocation1 [shape = 'u32[72,128]{1,0:T(1,128)}', space=vmem, size = 0x9000, scoped, tag = 'internal scratch']
  %s0 = inlined_call_operand.vmem [shape: f32[16,2], index: 0, kind: input, shape index: {}]
  %s1 = inlined_call_operand.vmem [shape: f32[16,128], index: 1, kind: input, shape index: {}]
  %s2 = inlined_call_operand.hbm [shape: f32[16,128], index: 2, kind: input, shape index: {}]
  %s3 = inlined_call_operand.hbm [shape: f32[16,128], index: 3, kind: output, shape index: {}]
  %s4 = sld [smem:[#allocation0]]
  $region49: #{tpu_custom_call.1} parent=0
    _
  %s6 = ssub.s32 1, %s4
  %s7 = scalar_select 0, %s6, %s4
  $region1: #{tpu_custom_call.1} parent=0
    #allocation2 [shape = 'u8[8192]{0}', space=vmem, size = 0x2000, scoped, tag = 'input window, operand 2']
    #allocation3 [shape = 's32[2]{0}', space=sflag, size = 0x8, scoped, tag = 'scoped memory for tpu_custom_call.1']
    #allocation4 [shape = 's32[2]{0}', space=sflag, size = 0x8, scoped, tag = 'scoped memory for tpu_custom_call.1']
    #allocation5 [shape = 'u8[8192]{0}', space=vmem, size = 0x2000, scoped, tag = 'output window, operand 0']
    %8 = vsyncpa [#allocation3], 0
    %s9 = scalar_lea.sflag [#allocation3], 1
    %10 = vsyncpa %s9, 0
    %11 = vsyncpa [#allocation4], 0
    %s12 = scalar_lea.sflag [#allocation4], 1
    %13 = vsyncpa %s12, 0
    loop: start=0, step=1, limit=4
    $region2: #{tpu_custom_call.1} parent=1 // loop_pre_header
      _
    $region3: #{tpu_custom_call.1} parent=1 // loop_header
      %s15 = sphi 0, %s19
      %p16 = scmp.ge.s32.totalorder %s15, 4
      %s25 = sphi 0, %s27
      %s28 = sphi 0, %s25
      %s29 = sphi 0, %s28
      %s45 = sphi 0, %s29
      %s51 = sphi 0, %s53
      %s54 = sphi 0, %s51
      %s55 = sphi 0, %s54
      %s71 = sphi 0, %s55
      %s77 = sphi 0, %s79
      %s80 = sphi 0, %s77
      %s81 = sphi 0, %s80
      %s97 = sphi 0, %s81
      %s103 = sphi 0, %s105
      %s106 = sphi 0, %s103
      %s107 = sphi 0, %s106
      %s123 = sphi 0, %s107
    $region4: #{tpu_custom_call.1} parent=1 // loop_header_branch
      %18 = sbr.rel (%p16) target = $region8
    $region5: #{tpu_custom_call.1} parent=1 // loop_body
      %s20 = ssub.s32 %s15, 1
      %s21 = ssub.s32 %s15, 2
      %s22 = sadd.s32 %s15, 1
      %s23 = ssub.s32 %s15, %s22
      %p24 = scmp.eq.s32.totalorder %s23, 0
      %s26 = sadd.s32 %s25, 1
      %s27 = scalar_select %p24, %s25, %s26
      %p30 = pneg %p24
      %p31 = scmp.eq.s32.totalorder %s15, 1
      %p32 = por %p30, %p31
      %p33 = scmp.ne.s32.totalorder %s25, %s28
      %p34 = scmp.eq.s32.totalorder %s15, 0
      %p35 = por %p33, %p34
      %p36 = scmp.ne.s32.totalorder %s25, %s28
      %p37 = scmp.eq.s32.totalorder %s20, 1
      %p38 = por %p36, %p37
      %p39 = scmp.ne.s32.totalorder %s28, %s29
      %p40 = scmp.eq.s32.totalorder %s20, 0
      %p41 = por %p39, %p40
      %p42 = scmp.ne.s32.totalorder %s28, %s29
      %p43 = scmp.eq.s32.totalorder %s21, 1
      %p44 = por %p42, %p43
      %p46 = scmp.ne.s32.totalorder %s29, %s45
      %p47 = scmp.eq.s32.totalorder %s21, 0
      %p48 = por %p46, %p47
      %s49 = ssub.s32 %s15, %s22
      %p50 = scmp.eq.s32.totalorder %s49, 0
      %s52 = sadd.s32 %s51, 1
      %s53 = scalar_select %p50, %s51, %s52
      %p56 = pneg %p50
      %p57 = scmp.eq.s32.totalorder %s15, 1
      %p58 = por %p56, %p57
      %p59 = scmp.ne.s32.totalorder %s51, %s54
      %p60 = scmp.eq.s32.totalorder %s15, 0
      %p61 = por %p59, %p60
      %p62 = scmp.ne.s32.totalorder %s51, %s54
      %p63 = scmp.eq.s32.totalorder %s20, 1
      %p64 = por %p62, %p63
      %p65 = scmp.ne.s32.totalorder %s54, %s55
      %p66 = scmp.eq.s32.totalorder %s20, 0
      %p67 = por %p65, %p66
      %p68 = scmp.ne.s32.totalorder %s54, %s55
      %p69 = scmp.eq.s32.totalorder %s21, 1
      %p70 = por %p68, %p69
      %p72 = scmp.ne.s32.totalorder %s55, %s71
      %p73 = scmp.eq.s32.totalorder %s21, 0
      %p74 = por %p72, %p73
      %s75 = ssub.s32 %s15, %s22
      %p76 = scmp.eq.s32.totalorder %s75, 0
      %s78 = sadd.s32 %s77, 1
      %s79 = scalar_select %p76, %s77, %s78
      %p82 = pneg %p76
      %p83 = scmp.eq.s32.totalorder %s15, 1
      %p84 = por %p82, %p83
      %p85 = scmp.ne.s32.totalorder %s77, %s80
      %p86 = scmp.eq.s32.totalorder %s15, 0
      %p87 = por %p85, %p86
      %p88 = scmp.ne.s32.totalorder %s77, %s80
      %p89 = scmp.eq.s32.totalorder %s20, 1
      %p90 = por %p88, %p89
      %p91 = scmp.ne.s32.totalorder %s80, %s81
      %p92 = scmp.eq.s32.totalorder %s20, 0
      %p93 = por %p91, %p92
      %p94 = scmp.ne.s32.totalorder %s80, %s81
      %p95 = scmp.eq.s32.totalorder %s21, 1
      %p96 = por %p94, %p95
      %p98 = scmp.ne.s32.totalorder %s81, %s97
      %p99 = scmp.eq.s32.totalorder %s21, 0
      %p100 = por %p98, %p99
      %s101 = ssub.s32 %s15, %s22
      %p102 = scmp.eq.s32.totalorder %s101, 0
      %s104 = sadd.s32 %s103, 1
      %s105 = scalar_select %p102, %s103, %s104
      %p108 = pneg %p102
      %p109 = scmp.eq.s32.totalorder %s15, 1
      %p110 = por %p108, %p109
      %p111 = scmp.ne.s32.totalorder %s103, %s106
      %p112 = scmp.eq.s32.totalorder %s15, 0
      %p113 = por %p111, %p112
      %p114 = scmp.ne.s32.totalorder %s103, %s106
      %p115 = scmp.eq.s32.totalorder %s20, 1
      %p116 = por %p114, %p115
      %p117 = scmp.ne.s32.totalorder %s106, %s107
      %p118 = scmp.eq.s32.totalorder %s20, 0
      %p119 = por %p117, %p118
      %p120 = scmp.ne.s32.totalorder %s106, %s107
      %p121 = scmp.eq.s32.totalorder %s21, 1
      %p122 = por %p120, %p121
      %p124 = scmp.ne.s32.totalorder %s107, %s123
      %p125 = scmp.eq.s32.totalorder %s21, 0
      %p126 = por %p124, %p125
      %p127 = scmp.le.s32.totalorder 1, %s15
      %p128 = scmp.lt.s32.totalorder %s15, 3
      %p129 = pnand %p127, %p128
      %p130 = pneg %p129
      // Predicated region
      $region9: #{tpu_custom_call.1} parent=5 // pred_check
        _
      $region10: #{tpu_custom_call.1} parent=5 // pred_check_branch
        %132 = sbr.rel (%p129) target = $region12
      $region11: #{tpu_custom_call.1} parent=5 // pred_region
        %s133 = ssub.s32 %s15, 1
      $region12: #{tpu_custom_call.1} parent=5 // pred_fallthru
        _
      %p134 = scmp.lt.s32.totalorder %s15, 2
      // Predicated region
      $region13: #{tpu_custom_call.1} parent=5 // pred_check
        %p135 = pneg %p134
      $region14: #{tpu_custom_call.1} parent=5 // pred_check_branch
        %137 = sbr.rel (%p135) target = $region16
      $region15: #{tpu_custom_call.1} parent=5 // pred_region
        // Predicated region
        $region17: #{tpu_custom_call.1} parent=15 // pred_check
          %p138 = pneg %p35
        $region18: #{tpu_custom_call.1} parent=15 // pred_check_branch
          %140 = sbr.rel (%p138) target = $region20
        $region19: #{tpu_custom_call.1} parent=15 // pred_region
          %p141 = scmp.lt.s32.totalorder %s15, 1
          %s142 = scalar_select %p141, %s15, 1
          %s143 = smul.addr %s142, 8
          %s144 = scalar_lea.vmem %s0, %s143
        $region20: #{tpu_custom_call.1} parent=15 // pred_fallthru
          _
        // Predicated region
        $region21: #{tpu_custom_call.1} parent=15 // pred_check
          %p145 = pneg %p61
        $region22: #{tpu_custom_call.1} parent=15 // pred_check_branch
          %147 = sbr.rel (%p145) target = $region24
        $region23: #{tpu_custom_call.1} parent=15 // pred_region
          %p148 = scmp.lt.s32.totalorder %s15, 1
          %s149 = scalar_select %p148, %s15, 1
          %s150 = smul.addr %s149, 8
          %s151 = scalar_lea.vmem %s1, %s150
        $region24: #{tpu_custom_call.1} parent=15 // pred_fallthru
          _
        // Predicated region
        $region25: #{tpu_custom_call.1} parent=15 // pred_check
          %p152 = pneg %p87
        $region26: #{tpu_custom_call.1} parent=15 // pred_check_branch
          %154 = sbr.rel (%p152) target = $region28
        $region27: #{tpu_custom_call.1} parent=15 // pred_region
          %s155 = sand.u32 %s77, 1
          %s156 = scalar_lea.sflag [#allocation3], %s155
          %s157 = sand.u32 %s77, 1
          %s158 = smul.addr %s157, 8
          %s159 = scalar_lea.vmem [#allocation2], %s158
          %161 = vsyncadd %s156, 0
          %s162 = smul.addr %s15, 8
          %s163 = scalar_lea.hbm %s2, %s162
          %s165 = sshll.u32 %s163, 4
          %s166 = int_to_ptr.hbm [resolvable:$true] %s165
          %s167 = sshll.u32 %s159, 4
          %s168 = int_to_ptr.vmem [resolvable:$true] %s167
          %170 = dma.hbm_to_vmem [thread:$0]  %s166, 128, %s168, %s156
        $region28: #{tpu_custom_call.1} parent=15 // pred_fallthru
          _
      $region16: #{tpu_custom_call.1} parent=5 // pred_fallthru
        _
      %p171 = scmp.le.s32.totalorder 1, %s15
      %p172 = scmp.lt.s32.totalorder %s15, 3
      %p173 = pnand %p171, %p172
      %p174 = pneg %p173
      // Predicated region
      $region29: #{tpu_custom_call.1} parent=5 // pred_check
        _
      $region30: #{tpu_custom_call.1} parent=5 // pred_check_branch
        %176 = sbr.rel (%p173) target = $region32
      $region31: #{tpu_custom_call.1} parent=5 // pred_region
        %s177 = ssub.s32 %s15, 1
        %s178 = sand.u32 %s80, 1
        %s179 = scalar_lea.sflag [#allocation3], %s178
        %s180 = sand.u32 %s80, 1
        %s181 = smul.addr %s180, 8
        %s182 = scalar_lea.vmem [#allocation2], %s181
        // Predicated region
        $region33: #{tpu_custom_call.1} parent=31 // pred_check
          %p183 = pneg %p93
        $region34: #{tpu_custom_call.1} parent=31 // pred_check_branch
          %185 = sbr.rel (%p183) target = $region36
        $region35: #{tpu_custom_call.1} parent=31 // pred_region
          %187 = dma.done %s179, 128
        $region36: #{tpu_custom_call.1} parent=31 // pred_fallthru
          _
        %p188 = scmp.lt.s32.totalorder %s20, 1
        %s189 = scalar_select %p188, %s20, 1
        %s190 = smul.addr %s189, 8
        %s191 = scalar_lea.vmem %s0, %s190
        %p192 = pneg %p41
        %p193 = pneg %p38
        %p194 = scmp.lt.s32.totalorder %s20, 1
        %s195 = scalar_select %p194, %s20, 1
        %s196 = smul.addr %s195, 8
        %s197 = scalar_lea.vmem %s1, %s196
        %p198 = pneg %p67
        %p199 = pneg %p64
        %s200 = sand.u32 %s80, 1
        %s201 = scalar_lea.sflag [#allocation3], %s200
        %s202 = sand.u32 %s80, 1
        %s203 = smul.addr %s202, 8
        %s204 = scalar_lea.vmem [#allocation2], %s203
        %p205 = pneg %p93
        %p206 = pneg %p90
        %p207 = pneg %p119
        %p208 = pneg %p116
        %s209 = sand.u32 %s106, 1
        %s210 = scalar_lea.sflag [#allocation4], %s209
        %s211 = sand.u32 %s106, 1
        %s212 = smul.addr %s211, 8
        %s213 = scalar_lea.vmem [#allocation5], %s212
        %p214 = scmp.lt.s32.totalorder %s20, 1
        %s215 = scalar_select %p214, %s20, 1
        %s216 = smul.addr %s215, 8
        %s217 = scalar_lea.vmem %s0, %s216
        %p218 = scmp.lt.s32.totalorder %s20, 1
        %s219 = scalar_select %p218, %s20, 1
        %s220 = smul.addr %s219, 8
        %s221 = scalar_lea.vmem %s1, %s220
        %v222 = vld [vmem:[%s217] sm:$0xff]
        %v223 = vld [vmem:[%s221] sm:$0xff]
        %v224 = vld [vmem:[%s182] sm:$0xff]
        %226 = vset.pattern.permute.xlu0 0
        %227 = vperm.xlu0 %226, %v222
        %v228 = vpop.permute.xlu0 %227
        %v230 = vmul.f32 %v228, %v223
        %231 = vset.pattern.permute.xlu0 1
        %232 = vperm.xlu0 %231, %v222
        %v233 = vpop.permute.xlu0 %232
        %v235 = vmul.f32 %v233, %v224
        %v236 = vadd.f32 %v230, %v235
        %237 = vst [vmem:[%s213] sm:$0xff] %v236
        %s238 = sand.u32 %s106, 1
        %s239 = scalar_lea.sflag [#allocation4], %s238
        %s240 = sand.u32 %s106, 1
        %s241 = smul.addr %s240, 8
        %s242 = scalar_lea.vmem [#allocation5], %s241
        // Predicated region
        $region37: #{tpu_custom_call.1} parent=31 // pred_check
          %p243 = pneg %p116
        $region38: #{tpu_custom_call.1} parent=31 // pred_check_branch
          %245 = sbr.rel (%p243) target = $region40
        $region39: #{tpu_custom_call.1} parent=31 // pred_region
          %247 = vsyncadd %s239, 0
          %s248 = smul.addr %s20, 8
          %s249 = scalar_lea.hbm %s3, %s248
          %s251 = sshll.u32 %s242, 4
          %s252 = int_to_ptr.vmem [resolvable:$true] %s251
          %s253 = sshll.u32 %s249, 4
          %s254 = int_to_ptr.hbm [resolvable:$true] %s253
          %256 = dma.vmem_to_hbm [thread:$0]  %s252, 128, %s254, %s239
        $region40: #{tpu_custom_call.1} parent=31 // pred_fallthru
          _
      $region32: #{tpu_custom_call.1} parent=5 // pred_fallthru
        _
      %p257 = scmp.le.s32.totalorder 2, %s15
      // Predicated region
      $region41: #{tpu_custom_call.1} parent=5 // pred_check
        %p258 = pneg %p257
      $region42: #{tpu_custom_call.1} parent=5 // pred_check_branch
        %260 = sbr.rel (%p258) target = $region44
      $region43: #{tpu_custom_call.1} parent=5 // pred_region
        %s261 = ssub.s32 %s15, 2
        // Predicated region
        $region45: #{tpu_custom_call.1} parent=43 // pred_check
          %p262 = pneg %p122
        $region46: #{tpu_custom_call.1} parent=43 // pred_check_branch
          %264 = sbr.rel (%p262) target = $region48
        $region47: #{tpu_custom_call.1} parent=43 // pred_region
          %s265 = sand.u32 %s107, 1
          %s266 = scalar_lea.sflag [#allocation4], %s265
          %s267 = sand.u32 %s107, 1
          %s268 = smul.addr %s267, 8
          %s269 = scalar_lea.vmem [#allocation5], %s268
          %271 = dma.done %s266, 128
        $region48: #{tpu_custom_call.1} parent=43 // pred_fallthru
          _
      $region44: #{tpu_custom_call.1} parent=5 // pred_fallthru
        _
    $region6: #{tpu_custom_call.1} parent=1 // loop_footer
      %s19 = sadd.s32 1, %s15
    $region7: #{tpu_custom_call.1} parent=1 // loop_footer_branch
      %14 = sbr.rel target = $region3
    $region8: #{tpu_custom_call.1} parent=1 // loop_exit
      _
    %272 = vsyncpa [#allocation3], 1
    %s273 = scalar_lea.sflag [#allocation3], 1
    %274 = vsyncpa %s273, 1
    %275 = vsyncpa [#allocation4], 1
    %s276 = scalar_lea.sflag [#allocation4], 1
    %277 = vsyncpa %s276, 1

</llo_original>
